<compile_context>
chip_gen: v7x
topology: tpu7x:2x2x1
jax: 0.10.0
libtpu: 0.0.40
codegen_flags: <defaults>
</compile_context>

<pallas_src>
import jax
import jax.numpy as jnp
from jax import lax
from jax.experimental import pallas as pl
from jax.experimental.pallas import tpu as pltpu


# ----------------------------------------------------------------------------
# Synthetic per-atom energy model (stand-in for `func`), pure JAX reference.
# ----------------------------------------------------------------------------
def per_atom_energy_ref(pos, W1, w):
    """pos: [N,3] -> per-atom energy [N] (PER_ATOM_ENERGY squeezed)."""
    z = jnp.tanh(pos @ W1)                           # [N, H]
    e_self = z @ w[0]                                # [N]
    diff = pos[:, None, :] - pos[None, :, :]         # [N, N, 3]
    s = jnp.sum(diff * diff, axis=-1)                # [N, N]
    mask = 1.0 - jnp.eye(pos.shape[0], dtype=pos.dtype)
    e_pair = jnp.sum(mask / (1.0 + s), axis=1)       # [N]
    return e_self + e_pair


# ----------------------------------------------------------------------------
# Pallas kernel factory: analytic negated Jacobian (partial forces) for one
# row tile of the energy index i, plus that tile's slice of the total force.
# ----------------------------------------------------------------------------
def _make_partial_force_kernel(n_valid: int, n_padded: int):
    need_col_mask = n_valid != n_padded   # only pay for padding when present

    def kernel(pos_tile_ref, posT_ref, w1_ref, w1w_ref, pfT_ref, f_ref):
        it = pl.program_id(0)
        TI = pos_tile_ref.shape[0]          # rows (energy indices) in this tile
        Np = posT_ref.shape[1]              # padded number of atoms

        pos_tile = pos_tile_ref[...]        # [TI, 3]  this tile's atom positions
        w1 = w1_ref[...]                    # [3, H]
        w1w = w1w_ref[...]                  # [3, H]  = W1 * w (w folded in wrapper)

        # Per-coordinate views (static slices):
        #   xi[d]: [TI, 1] column of this tile's d-coordinate
        #   xj[d]: [1, Np] row of all atoms' d-coordinate (lane-dense)
        xi = [pos_tile[:, d:d + 1] for d in range(3)]
        xj = [posT_ref[d:d + 1, :] for d in range(3)]

        # Pairwise geometry as lane-dense [TI, Np] slabs.  The per-coordinate
        # diffs are recomputed inside the d-loop below, so s/inv die here.
        s = ((xi[0] - xj[0]) * (xi[0] - xj[0])
             + (xi[1] - xj[1]) * (xi[1] - xj[1])
             + (xi[2] - xj[2]) * (xi[2] - xj[2]))
        inv = 1.0 / (1.0 + s)
        two_dphi = -2.0 * (inv * inv)        # 2*phi'(s); no diag mask needed
        if need_col_mask:
            # Zero contributions from padded (ghost) atom columns.
            col_valid = lax.broadcasted_iota(jnp.int32, (1, Np), 1) < n_valid
            two_dphi = jnp.where(col_valid, two_dphi, 0.0)

        # Diagonal mask from small iotas (broadcast compare, no full int32 slabs).
        local_row = lax.broadcasted_iota(jnp.int32, (TI, 1), 0)
        col_rel = lax.broadcasted_iota(jnp.int32, (1, Np), 1) - it * TI
        is_diag = col_rel == local_row                              # [TI, Np] bool

        # Self-term gradient factor, VPU/EUP only (K=3 matmul not worth the MXU):
        #   z[i,h] = sum_d pos[i,d] * W1[d,h] ; sech2 = 1 - tanh(z)^2
        z = xi[0] * w1[0:1, :] + xi[1] * w1[1:2, :] + xi[2] * w1[2:3, :]  # [TI, H]
        t = jnp.tanh(z)                                                   # EUP
        sech2 = 1.0 - t * t                                               # [TI, H]

        f_cols = []
        for d in range(3):
            diff_d = xi[d] - xj[d]                      # recompute: bounds live range
            # q_d[i,j] = 2*phi'(s_ij)*(p_i - p_j)_d  ==  pf[i,j,d] off-diagonal
            q_d = two_dphi * diff_d                                   # [TI, Np]
            diag_pair_d = jnp.sum(q_d, axis=1, keepdims=True)         # [TI, 1]
            # g_self_d[i] = sum_h w_h * sech2[i,h] * W1[d,h]
            g_self_d = jnp.sum(sech2 * w1w[d:d + 1, :], axis=1, keepdims=True)

            # Partial forces: diagonal via a single select (negation folded).
            diag_val = -(g_self_d + diag_pair_d)                      # [TI, 1]
            pfT_ref[d, :, :] = jnp.where(is_diag, diag_val, q_d).astype(pfT_ref.dtype)

            # Total force for this tile's atoms (analytic, uses dphi symmetry):
            #   f[j,d] = sum_i pf[i,j,d] = -(g_self_d[j] + 2*rowsum_j(q))
            f_cols.append(-(g_self_d + 2.0 * diag_pair_d))            # [TI, 1]

        # One [TI,3] store instead of three masked 1-lane stores.
        f_ref[...] = jnp.concatenate(f_cols, axis=1).astype(f_ref.dtype)

    return kernel


def partial_force_output(pos, W1, w, *, tile_rows=None, pf_dtype=jnp.float32,
                         layout="planar", vmem_limit_bytes=None):
    """Mirrors PartialForceOutput.forward (partial + total forces).

    Returns (pf, forces).  With layout="planar" (default, no extra HBM pass),
    pf has shape [3, N, N] with pf[d, i, j] == partial_forces[i, j, d].
    layout="module" returns the original [N, N, 3] layout (extra transpose).
    """
    N = pos.shape[0]
    H = W1.shape[1]
    pf_itemsize = jnp.dtype(pf_dtype).itemsize

    # --- tile selection ------------------------------------------------------
    if tile_rows is None:
        # Target ~16 MiB for the double-buffered pf output block, keep the
        # i-grid >= 2 steps so both v7x TensorCores get work.
        budget = 16 * 2 ** 20
        tile_rows = max(8, budget // (2 * 3 * max(N, 1) * pf_itemsize))
        if N >= 16:
            tile_rows = min(tile_rows, max(8, N // 2))
    TI = int(-(-int(tile_rows) // 8) * 8)        # multiple of 8 (sublane tile)
    Np = int(-(-N // TI) * TI)                    # pad atoms to a multiple of TI

    # --- input prep (layout plumbing, all O(N)) ------------------------------
    pos_f32 = pos.astype(jnp.float32)
    pos_p = jnp.pad(pos_f32, ((0, Np - N), (0, 0))) if Np != N else pos_f32
    posT = jnp.transpose(pos_p)                   # [3, Np] coordinate-plane layout
    W1f = W1.astype(jnp.float32)
    W1w = W1f * w.astype(jnp.float32)             # fold w into the W1 contraction

    kernel = _make_partial_force_kernel(N, Np)

    # --- VMEM budget + cost hints --------------------------------------------
    block_bytes = (2 * 3 * TI * Np * pf_itemsize      # double-buffered pf block
                   + 2 * TI * 3 * 4                   # pos tile
                   + 3 * Np * 4                       # posT (resident)
                   + 2 * 2 * 3 * H * 4                # W1, W1*w
                   + 2 * TI * 3 * 4)                  # f block
    if vmem_limit_bytes is None:
        # 48 MiB is safe on v5e/v6e (128 MiB) and v7x (64 MiB physical).
        vmem_limit_bytes = int(min(48 * 2 ** 20, max(32 * 2 ** 20, 2 * block_bytes)))

    cost = pl.CostEstimate(
        flops=int(20 * Np * Np + 8 * Np * H),
        transcendentals=int(Np * H + Np * Np),        # tanh + pairwise reciprocal
        bytes_accessed=int(3 * Np * Np * pf_itemsize  # pf writeback dominates
                           + 2 * 3 * Np * 4 + 2 * 3 * H * 4 + Np * 3 * 4),
    )

    pfT_full, f_full = pl.pallas_call(
        kernel,
        out_shape=(
            jax.ShapeDtypeStruct((3, Np, Np), pf_dtype),    # pfT[d, i, j]
            jax.ShapeDtypeStruct((Np, 3), jnp.float32),     # total forces
        ),
        grid_spec=pltpu.PrefetchScalarGridSpec(
            num_scalar_prefetch=0,
            grid=(Np // TI,),
            in_specs=[
                pl.BlockSpec((TI, 3), lambda i: (i, 0)),    # this tile's rows
                pl.BlockSpec((3, Np), lambda i: (0, 0)),    # all atoms, resident
                pl.BlockSpec((3, H), lambda i: (0, 0)),     # W1, resident
                pl.BlockSpec((3, H), lambda i: (0, 0)),     # W1 * w, resident
            ],
            out_specs=(
                pl.BlockSpec((3, TI, Np), lambda i: (0, i, 0)),   # lane-dense pf
                pl.BlockSpec((TI, 3), lambda i: (i, 0)),
            ),
        ),
        compiler_params=pltpu.CompilerParams(
            dimension_semantics=("parallel",),   # i-axis is embarrassingly parallel
            vmem_limit_bytes=vmem_limit_bytes,
        ),
        cost_estimate=cost,
    )(pos_p, posT, W1f, W1w)

    pfT = pfT_full if Np == N else pfT_full[:, :N, :N]
    f = f_full if Np == N else f_full[:N]

    if layout == "planar":
        return pfT, f
    elif layout == "module":
        # Only for consumers that insist on the original [N, N, 3] convention;
        # this re-reads/re-writes 3*N^2 elements, so prefer "planar".
        return jnp.transpose(pfT, (1, 2, 0)), f
    else:
        raise ValueError(f"unknown layout: {layout!r}")


if __name__ == "__main__":
    N, H = 16, 32   # atoms, hidden width of synthetic energy model
    TI = 8          # row tile -> even 2-step grid (exercises tiling / megacore)

    key = jax.random.PRNGKey(0)
    k_pos, k_w1, k_w = jax.random.split(key, 3)
    pos = jax.random.normal(k_pos, (N, 3), dtype=jnp.float32)
    W1 = jax.random.normal(k_w1, (3, H), dtype=jnp.float32) * 0.3
    w = jax.random.normal(k_w, (1, H), dtype=jnp.float32) * 0.3

    # --- aligned case (no padding), planar output -----------------------------
    pfT, f = partial_force_output(pos, W1, w, tile_rows=TI)
    jax.block_until_ready((pfT, f))

    # Reference: jacobian of the same energy model
    # (what torch.autograd.functional.jacobian does in the module).
    jac_ref = jax.jacrev(lambda p: per_atom_energy_ref(p, W1, w))(pos)  # [N, N, 3]
    pf_ref = -jac_ref
    f_ref = pf_ref.sum(axis=0)
    pfT_ref = jnp.transpose(pf_ref, (2, 0, 1))                          # [3, N, N]

    assert pfT.shape == (3, N, N) and f.shape == (N, 3)
    assert jnp.allclose(pfT, pfT_ref, atol=1e-5, rtol=1e-5), "partial forces mismatch"
    assert jnp.allclose(f, f_ref, atol=1e-5, rtol=1e-5), "total forces mismatch"

    # --- unaligned case (exercises padding + column mask) ---------------------
    N2 = 13
    pos2 = pos[:N2]
    pfT2, f2 = partial_force_output(pos2, W1, w, tile_rows=TI)
    jax.block_until_ready((pfT2, f2))

    jac2 = jax.jacrev(lambda p: per_atom_energy_ref(p, W1, w))(pos2)
    pf2_ref = -jac2
    f2_ref = pf2_ref.sum(axis=0)
    assert pfT2.shape == (3, N2, N2) and f2.shape == (N2, 3)
    assert jnp.allclose(pfT2, jnp.transpose(pf2_ref, (2, 0, 1)),
                        atol=1e-5, rtol=1e-5), "padded partial forces mismatch"
    assert jnp.allclose(f2, f2_ref, atol=1e-5, rtol=1e-5), "padded total forces mismatch"

    print("KERNEL_OK")
</pallas_src>

<mosaic_0001>
module attributes {stable_mosaic.version = 11 : i64} {
  func.func @kernel(%arg0: i32, %arg1: memref<8x3xf32, #tpu.memory_space<vmem>>, %arg2: memref<3x16xf32, #tpu.memory_space<vmem>>, %arg3: memref<3x32xf32, #tpu.memory_space<vmem>>, %arg4: memref<3x32xf32, #tpu.memory_space<vmem>>, %arg5: memref<3x8x16xf32, #tpu.memory_space<vmem>>, %arg6: memref<8x3xf32, #tpu.memory_space<vmem>>) attributes {dimension_semantics = [#tpu.dimension_semantics<parallel>], iteration_bounds = array<i64: 2>, scalar_prefetch = 0 : i64, scratch_operands = 0 : i64, tpu.core_type = #tpu.core_type<tc>, window_params = [{transform_indices = @transform_0, window_bounds = array<i64: 8, 3>}, {pipeline_mode = #tpu.pipeline_mode<synchronous>, transform_indices = @transform_1, window_bounds = array<i64: 3, 16>}, {pipeline_mode = #tpu.pipeline_mode<synchronous>, transform_indices = @transform_2, window_bounds = array<i64: 3, 32>}, {pipeline_mode = #tpu.pipeline_mode<synchronous>, transform_indices = @transform_3, window_bounds = array<i64: 3, 32>}, {transform_indices = @transform_4, window_bounds = array<i64: 3, 8, 16>}, {transform_indices = @transform_5, window_bounds = array<i64: 8, 3>}]} {
    %c0 = arith.constant 0 : index
    %c0_0 = arith.constant 0 : index
    %0 = vector.load %arg1[%c0, %c0_0] : memref<8x3xf32, #tpu.memory_space<vmem>>, vector<8x3xf32>
    %c0_1 = arith.constant 0 : index
    %c0_2 = arith.constant 0 : index
    %1 = vector.load %arg3[%c0_1, %c0_2] : memref<3x32xf32, #tpu.memory_space<vmem>>, vector<3x32xf32>
    %c0_3 = arith.constant 0 : index
    %c0_4 = arith.constant 0 : index
    %2 = vector.load %arg4[%c0_3, %c0_4] : memref<3x32xf32, #tpu.memory_space<vmem>>, vector<3x32xf32>
    %3 = vector.extract_strided_slice %0 {offsets = [0, 0], sizes = [8, 1], strides = [1, 1]} : vector<8x3xf32> to vector<8x1xf32>
    %4 = vector.extract_strided_slice %0 {offsets = [0, 1], sizes = [8, 1], strides = [1, 1]} : vector<8x3xf32> to vector<8x1xf32>
    %5 = vector.extract_strided_slice %0 {offsets = [0, 2], sizes = [8, 1], strides = [1, 1]} : vector<8x3xf32> to vector<8x1xf32>
    %c0_5 = arith.constant 0 : index
    %c0_6 = arith.constant 0 : index
    %6 = vector.load %arg2[%c0_5, %c0_6] : memref<3x16xf32, #tpu.memory_space<vmem>>, vector<1x16xf32>
    %c1 = arith.constant 1 : index
    %c0_7 = arith.constant 0 : index
    %7 = vector.load %arg2[%c1, %c0_7] : memref<3x16xf32, #tpu.memory_space<vmem>>, vector<1x16xf32>
    %c2 = arith.constant 2 : index
    %c0_8 = arith.constant 0 : index
    %8 = vector.load %arg2[%c2, %c0_8] : memref<3x16xf32, #tpu.memory_space<vmem>>, vector<1x16xf32>
    %9 = vector.broadcast %3 : vector<8x1xf32> to vector<8x16xf32>
    %10 = vector.broadcast %6 : vector<1x16xf32> to vector<8x16xf32>
    %11 = arith.subf %9, %10 : vector<8x16xf32>
    %12 = vector.broadcast %3 : vector<8x1xf32> to vector<8x16xf32>
    %13 = vector.broadcast %6 : vector<1x16xf32> to vector<8x16xf32>
    %14 = arith.subf %12, %13 : vector<8x16xf32>
    %15 = arith.mulf %11, %14 : vector<8x16xf32>
    %16 = vector.broadcast %4 : vector<8x1xf32> to vector<8x16xf32>
    %17 = vector.broadcast %7 : vector<1x16xf32> to vector<8x16xf32>
    %18 = arith.subf %16, %17 : vector<8x16xf32>
    %19 = vector.broadcast %4 : vector<8x1xf32> to vector<8x16xf32>
    %20 = vector.broadcast %7 : vector<1x16xf32> to vector<8x16xf32>
    %21 = arith.subf %19, %20 : vector<8x16xf32>
    %22 = arith.mulf %18, %21 : vector<8x16xf32>
    %23 = arith.addf %15, %22 : vector<8x16xf32>
    %24 = vector.broadcast %5 : vector<8x1xf32> to vector<8x16xf32>
    %25 = vector.broadcast %8 : vector<1x16xf32> to vector<8x16xf32>
    %26 = arith.subf %24, %25 : vector<8x16xf32>
    %27 = vector.broadcast %5 : vector<8x1xf32> to vector<8x16xf32>
    %28 = vector.broadcast %8 : vector<1x16xf32> to vector<8x16xf32>
    %29 = arith.subf %27, %28 : vector<8x16xf32>
    %30 = arith.mulf %26, %29 : vector<8x16xf32>
    %31 = arith.addf %23, %30 : vector<8x16xf32>
    %cst = arith.constant 1.000000e+00 : f32
    %32 = vector.broadcast %cst : f32 to vector<8x16xf32>
    %33 = arith.addf %32, %31 : vector<8x16xf32>
    %cst_9 = arith.constant 1.000000e+00 : f32
    %34 = vector.broadcast %cst_9 : f32 to vector<8x16xf32>
    %35 = arith.divf %34, %33 : vector<8x16xf32>
    %36 = arith.mulf %35, %35 : vector<8x16xf32>
    %cst_10 = arith.constant -2.000000e+00 : f32
    %37 = vector.broadcast %cst_10 : f32 to vector<8x16xf32>
    %38 = arith.mulf %37, %36 : vector<8x16xf32>
    %39 = tpu.iota {dimensions = array<i32: 0>} : vector<8x1xi32>
    %40 = tpu.iota {dimensions = array<i32: 1>} : vector<1x16xi32>
    %c8_i32 = arith.constant 8 : i32
    %41 = arith.muli %arg0, %c8_i32 : i32
    %42 = vector.broadcast %41 : i32 to vector<1x16xi32>
    %43 = arith.subi %40, %42 : vector<1x16xi32>
    %44 = vector.broadcast %43 : vector<1x16xi32> to vector<8x16xi32>
    %45 = vector.broadcast %39 : vector<8x1xi32> to vector<8x16xi32>
    %46 = arith.cmpi eq, %44, %45 : vector<8x16xi32>
    %47 = vector.extract_strided_slice %1 {offsets = [0, 0], sizes = [1, 32], strides = [1, 1]} : vector<3x32xf32> to vector<1x32xf32>
    %48 = vector.broadcast %3 : vector<8x1xf32> to vector<8x32xf32>
    %49 = vector.broadcast %47 : vector<1x32xf32> to vector<8x32xf32>
    %50 = arith.mulf %48, %49 : vector<8x32xf32>
    %51 = vector.extract_strided_slice %1 {offsets = [1, 0], sizes = [1, 32], strides = [1, 1]} : vector<3x32xf32> to vector<1x32xf32>
    %52 = vector.broadcast %4 : vector<8x1xf32> to vector<8x32xf32>
    %53 = vector.broadcast %51 : vector<1x32xf32> to vector<8x32xf32>
    %54 = arith.mulf %52, %53 : vector<8x32xf32>
    %55 = arith.addf %50, %54 : vector<8x32xf32>
    %56 = vector.extract_strided_slice %1 {offsets = [2, 0], sizes = [1, 32], strides = [1, 1]} : vector<3x32xf32> to vector<1x32xf32>
    %57 = vector.broadcast %5 : vector<8x1xf32> to vector<8x32xf32>
    %58 = vector.broadcast %56 : vector<1x32xf32> to vector<8x32xf32>
    %59 = arith.mulf %57, %58 : vector<8x32xf32>
    %60 = arith.addf %55, %59 : vector<8x32xf32>
    %61 = math.tanh %60 : vector<8x32xf32>
    %62 = arith.mulf %61, %61 : vector<8x32xf32>
    %cst_11 = arith.constant 1.000000e+00 : f32
    %63 = vector.broadcast %cst_11 : f32 to vector<8x32xf32>
    %64 = arith.subf %63, %62 : vector<8x32xf32>
    %65 = vector.broadcast %3 : vector<8x1xf32> to vector<8x16xf32>
    %66 = vector.broadcast %6 : vector<1x16xf32> to vector<8x16xf32>
    %67 = arith.subf %65, %66 : vector<8x16xf32>
    %68 = arith.mulf %38, %67 : vector<8x16xf32>
    %cst_12 = arith.constant dense<0.000000e+00> : vector<8xf32>
    %69 = vector.multi_reduction <add>, %68, %cst_12 [1] : vector<8x16xf32> to vector<8xf32>
    %70 = vector.shape_cast %69 : vector<8xf32> to vector<8x1xf32>
    %71 = vector.extract_strided_slice %2 {offsets = [0, 0], sizes = [1, 32], strides = [1, 1]} : vector<3x32xf32> to vector<1x32xf32>
    %72 = vector.broadcast %71 : vector<1x32xf32> to vector<8x32xf32>
    %73 = arith.mulf %64, %72 : vector<8x32xf32>
    %cst_13 = arith.constant dense<0.000000e+00> : vector<8xf32>
    %74 = vector.multi_reduction <add>, %73, %cst_13 [1] : vector<8x32xf32> to vector<8xf32>
    %75 = vector.shape_cast %74 : vector<8xf32> to vector<8x1xf32>
    %76 = arith.addf %75, %70 : vector<8x1xf32>
    %cst_14 = arith.constant 0.000000e+00 : f32
    %77 = vector.broadcast %cst_14 : f32 to vector<8x1xf32>
    %78 = arith.subf %77, %76 : vector<8x1xf32>
    %79 = vector.shape_cast %78 : vector<8x1xf32> to vector<8x1xf32>
    %80 = vector.broadcast %79 : vector<8x1xf32> to vector<8x16xf32>
    %81 = arith.select %46, %80, %68 : vector<8x16xi1>, vector<8x16xf32>
    %c0_15 = arith.constant 0 : index
    %c0_16 = arith.constant 0 : index
    %c0_17 = arith.constant 0 : index
    %82 = vector.load %arg5[%c0_15, %c0_16, %c0_17] : memref<3x8x16xf32, #tpu.memory_space<vmem>>, vector<1x8x16xf32>
    %83 = vector.shape_cast %82 : vector<1x8x16xf32> to vector<8x16xf32>
    %84 = vector.shape_cast %81 : vector<8x16xf32> to vector<1x8x16xf32>
    tpu.vector_store %arg5[%c0_15, %c0_16, %c0_17], %84 {strides = array<i32>} : memref<3x8x16xf32, #tpu.memory_space<vmem>>, vector<1x8x16xf32>,
    %cst_18 = arith.constant 2.000000e+00 : f32
    %85 = vector.broadcast %cst_18 : f32 to vector<8x1xf32>
    %86 = arith.mulf %85, %70 : vector<8x1xf32>
    %87 = arith.addf %75, %86 : vector<8x1xf32>
    %cst_19 = arith.constant 0.000000e+00 : f32
    %88 = vector.broadcast %cst_19 : f32 to vector<8x1xf32>
    %89 = arith.subf %88, %87 : vector<8x1xf32>
    %90 = vector.broadcast %4 : vector<8x1xf32> to vector<8x16xf32>
    %91 = vector.broadcast %7 : vector<1x16xf32> to vector<8x16xf32>
    %92 = arith.subf %90, %91 : vector<8x16xf32>
    %93 = arith.mulf %38, %92 : vector<8x16xf32>
    %cst_20 = arith.constant dense<0.000000e+00> : vector<8xf32>
    %94 = vector.multi_reduction <add>, %93, %cst_20 [1] : vector<8x16xf32> to vector<8xf32>
    %95 = vector.shape_cast %94 : vector<8xf32> to vector<8x1xf32>
    %96 = vector.extract_strided_slice %2 {offsets = [1, 0], sizes = [1, 32], strides = [1, 1]} : vector<3x32xf32> to vector<1x32xf32>
    %97 = vector.broadcast %96 : vector<1x32xf32> to vector<8x32xf32>
    %98 = arith.mulf %64, %97 : vector<8x32xf32>
    %cst_21 = arith.constant dense<0.000000e+00> : vector<8xf32>
    %99 = vector.multi_reduction <add>, %98, %cst_21 [1] : vector<8x32xf32> to vector<8xf32>
    %100 = vector.shape_cast %99 : vector<8xf32> to vector<8x1xf32>
    %101 = arith.addf %100, %95 : vector<8x1xf32>
    %cst_22 = arith.constant 0.000000e+00 : f32
    %102 = vector.broadcast %cst_22 : f32 to vector<8x1xf32>
    %103 = arith.subf %102, %101 : vector<8x1xf32>
    %104 = vector.shape_cast %103 : vector<8x1xf32> to vector<8x1xf32>
    %105 = vector.broadcast %104 : vector<8x1xf32> to vector<8x16xf32>
    %106 = arith.select %46, %105, %93 : vector<8x16xi1>, vector<8x16xf32>
    %c1_23 = arith.constant 1 : index
    %c0_24 = arith.constant 0 : index
    %c0_25 = arith.constant 0 : index
    %107 = vector.load %arg5[%c1_23, %c0_24, %c0_25] : memref<3x8x16xf32, #tpu.memory_space<vmem>>, vector<1x8x16xf32>
    %108 = vector.shape_cast %107 : vector<1x8x16xf32> to vector<8x16xf32>
    %109 = vector.shape_cast %106 : vector<8x16xf32> to vector<1x8x16xf32>
    tpu.vector_store %arg5[%c1_23, %c0_24, %c0_25], %109 {strides = array<i32>} : memref<3x8x16xf32, #tpu.memory_space<vmem>>, vector<1x8x16xf32>,
    %cst_26 = arith.constant 2.000000e+00 : f32
    %110 = vector.broadcast %cst_26 : f32 to vector<8x1xf32>
    %111 = arith.mulf %110, %95 : vector<8x1xf32>
    %112 = arith.addf %100, %111 : vector<8x1xf32>
    %cst_27 = arith.constant 0.000000e+00 : f32
    %113 = vector.broadcast %cst_27 : f32 to vector<8x1xf32>
    %114 = arith.subf %113, %112 : vector<8x1xf32>
    %115 = vector.broadcast %5 : vector<8x1xf32> to vector<8x16xf32>
    %116 = vector.broadcast %8 : vector<1x16xf32> to vector<8x16xf32>
    %117 = arith.subf %115, %116 : vector<8x16xf32>
    %118 = arith.mulf %38, %117 : vector<8x16xf32>
    %cst_28 = arith.constant dense<0.000000e+00> : vector<8xf32>
    %119 = vector.multi_reduction <add>, %118, %cst_28 [1] : vector<8x16xf32> to vector<8xf32>
    %120 = vector.shape_cast %119 : vector<8xf32> to vector<8x1xf32>
    %121 = vector.extract_strided_slice %2 {offsets = [2, 0], sizes = [1, 32], strides = [1, 1]} : vector<3x32xf32> to vector<1x32xf32>
    %122 = vector.broadcast %121 : vector<1x32xf32> to vector<8x32xf32>
    %123 = arith.mulf %64, %122 : vector<8x32xf32>
    %cst_29 = arith.constant dense<0.000000e+00> : vector<8xf32>
    %124 = vector.multi_reduction <add>, %123, %cst_29 [1] : vector<8x32xf32> to vector<8xf32>
    %125 = vector.shape_cast %124 : vector<8xf32> to vector<8x1xf32>
    %126 = arith.addf %125, %120 : vector<8x1xf32>
    %cst_30 = arith.constant 0.000000e+00 : f32
    %127 = vector.broadcast %cst_30 : f32 to vector<8x1xf32>
    %128 = arith.subf %127, %126 : vector<8x1xf32>
    %129 = vector.shape_cast %128 : vector<8x1xf32> to vector<8x1xf32>
    %130 = vector.broadcast %129 : vector<8x1xf32> to vector<8x16xf32>
    %131 = arith.select %46, %130, %118 : vector<8x16xi1>, vector<8x16xf32>
    %c2_31 = arith.constant 2 : index
    %c0_32 = arith.constant 0 : index
    %c0_33 = arith.constant 0 : index
    %132 = vector.load %arg5[%c2_31, %c0_32, %c0_33] : memref<3x8x16xf32, #tpu.memory_space<vmem>>, vector<1x8x16xf32>
    %133 = vector.shape_cast %132 : vector<1x8x16xf32> to vector<8x16xf32>
    %134 = vector.shape_cast %131 : vector<8x16xf32> to vector<1x8x16xf32>
    tpu.vector_store %arg5[%c2_31, %c0_32, %c0_33], %134 {strides = array<i32>} : memref<3x8x16xf32, #tpu.memory_space<vmem>>, vector<1x8x16xf32>,
    %cst_34 = arith.constant 2.000000e+00 : f32
    %135 = vector.broadcast %cst_34 : f32 to vector<8x1xf32>
    %136 = arith.mulf %135, %120 : vector<8x1xf32>
    %137 = arith.addf %125, %136 : vector<8x1xf32>
    %cst_35 = arith.constant 0.000000e+00 : f32
    %138 = vector.broadcast %cst_35 : f32 to vector<8x1xf32>
    %139 = arith.subf %138, %137 : vector<8x1xf32>
    %140 = tpu.concatenate %89, %114, %139 in 1 : vector<8x1xf32>, vector<8x1xf32>, vector<8x1xf32> -> vector<8x3xf32>
    %c0_36 = arith.constant 0 : index
    %c0_37 = arith.constant 0 : index
    %141 = vector.load %arg6[%c0_36, %c0_37] : memref<8x3xf32, #tpu.memory_space<vmem>>, vector<8x3xf32>
    tpu.vector_store %arg6[%c0_36, %c0_37], %140 {strides = array<i32>} : memref<8x3xf32, #tpu.memory_space<vmem>>, vector<8x3xf32>,
    return
  }
  func.func @transform_0(%arg0: i32) -> (i32, i32) {
    %c0_i32 = arith.constant 0 : i32
    %c0_i32_0 = arith.constant 0 : i32
    return %arg0, %c0_i32 : i32, i32
  }
  func.func @transform_1(%arg0: i32) -> (i32, i32) {
    %c0_i32 = arith.constant 0 : i32
    %c0_i32_0 = arith.constant 0 : i32
    %c0_i32_1 = arith.constant 0 : i32
    return %c0_i32, %c0_i32_0 : i32, i32
  }
  func.func @transform_2(%arg0: i32) -> (i32, i32) {
    %c0_i32 = arith.constant 0 : i32
    %c0_i32_0 = arith.constant 0 : i32
    %c0_i32_1 = arith.constant 0 : i32
    return %c0_i32, %c0_i32_0 : i32, i32
  }
  func.func @transform_3(%arg0: i32) -> (i32, i32) {
    %c0_i32 = arith.constant 0 : i32
    %c0_i32_0 = arith.constant 0 : i32
    %c0_i32_1 = arith.constant 0 : i32
    return %c0_i32, %c0_i32_0 : i32, i32
  }
  func.func @transform_4(%arg0: i32) -> (i32, i32, i32) {
    %c0_i32 = arith.constant 0 : i32
    %c0_i32_0 = arith.constant 0 : i32
    %c0_i32_1 = arith.constant 0 : i32
    return %c0_i32, %arg0, %c0_i32_0 : i32, i32, i32
  }
  func.func @transform_5(%arg0: i32) -> (i32, i32) {
    %c0_i32 = arith.constant 0 : i32
    %c0_i32_0 = arith.constant 0 : i32
    return %arg0, %c0_i32 : i32, i32
  }
}

</mosaic_0001>

<llo_original>
// kernel: tpu_custom_call.1
$region0: #{tpu_custom_call.1}
  #allocation0 [shape = 'u32[]', space=smem, size = 0x4, offset = 0x4, fixed_abs, tag = 'smem constant byte address 0x4 - core index']
  #allocation1 [shape = 'u32[144,128]{1,0:T(1,128)}', space=vmem, size = 0x12000, scoped, tag = 'internal scratch']
  %s0 = inlined_call_operand.vmem [shape: f32[16,3], index: 0, kind: input, shape index: {}]
  %s1 = inlined_call_operand.vmem [shape: f32[3,16], index: 1, kind: input, shape index: {}]
  %s2 = inlined_call_operand.vmem [shape: f32[3,32], index: 2, kind: input, shape index: {}]
  %s3 = inlined_call_operand.vmem [shape: f32[3,32], index: 3, kind: input, shape index: {}]
  %s4 = inlined_call_operand.hbm [shape: f32[3,16,16], index: 4, kind: output, shape index: {0}]
  %s5 = inlined_call_operand.vmem [shape: f32[16,3], index: 5, kind: output, shape index: {1}]
  %6 = xla_tuple %s4, %s5
  %s7 = sld [smem:[#allocation0]]
  $region57: #{tpu_custom_call.1} parent=0
    _
  %s9 = ssub.s32 1, %s7
  %s10 = scalar_select 0, %s9, %s7
  $region1: #{tpu_custom_call.1} parent=0
    #allocation2 [shape = 'u8[24576]{0}', space=vmem, size = 0x6000, scoped, tag = 'output window, operand 0']
    #allocation3 [shape = 's32[2]{0}', space=sflag, size = 0x8, scoped, tag = 'scoped memory for tpu_custom_call.1']
    %11 = vsyncpa [#allocation3], 0
    %s12 = scalar_lea.sflag [#allocation3], 1
    %13 = vsyncpa %s12, 0
    loop: start=0, step=1, limit=4
    $region2: #{tpu_custom_call.1} parent=1 // loop_pre_header
      _
    $region3: #{tpu_custom_call.1} parent=1 // loop_header
      %s15 = sphi 0, %s19
      %p16 = scmp.ge.s32.totalorder %s15, 4
      %s25 = sphi 0, %s27
      %s28 = sphi 0, %s25
      %s29 = sphi 0, %s28
      %s45 = sphi 0, %s29
      %s49 = sphi 0, %s49
      %s51 = sphi 0, %s49
      %s52 = sphi 0, %s51
      %s66 = sphi 0, %s52
      %s70 = sphi 0, %s70
      %s72 = sphi 0, %s70
      %s73 = sphi 0, %s72
      %s87 = sphi 0, %s73
      %s91 = sphi 0, %s91
      %s93 = sphi 0, %s91
      %s94 = sphi 0, %s93
      %s108 = sphi 0, %s94
      %s114 = sphi 0, %s116
      %s117 = sphi 0, %s114
      %s118 = sphi 0, %s117
      %s134 = sphi 0, %s118
      %s140 = sphi 0, %s142
      %s143 = sphi 0, %s140
      %s144 = sphi 0, %s143
      %s160 = sphi 0, %s144
    $region4: #{tpu_custom_call.1} parent=1 // loop_header_branch
      %18 = sbr.rel (%p16) target = $region8
    $region5: #{tpu_custom_call.1} parent=1 // loop_body
      %s20 = ssub.s32 %s15, 1
      %s21 = ssub.s32 %s15, 2
      %s22 = sadd.s32 %s15, 1
      %s23 = ssub.s32 %s15, %s22
      %p24 = scmp.eq.s32.totalorder %s23, 0
      %s26 = sadd.s32 %s25, 1
      %s27 = scalar_select %p24, %s25, %s26
      %p30 = pneg %p24
      %p31 = scmp.eq.s32.totalorder %s15, 1
      %p32 = por %p30, %p31
      %p33 = scmp.ne.s32.totalorder %s25, %s28
      %p34 = scmp.eq.s32.totalorder %s15, 0
      %p35 = por %p33, %p34
      %p36 = scmp.ne.s32.totalorder %s25, %s28
      %p37 = scmp.eq.s32.totalorder %s20, 1
      %p38 = por %p36, %p37
      %p39 = scmp.ne.s32.totalorder %s28, %s29
      %p40 = scmp.eq.s32.totalorder %s20, 0
      %p41 = por %p39, %p40
      %p42 = scmp.ne.s32.totalorder %s28, %s29
      %p43 = scmp.eq.s32.totalorder %s21, 1
      %p44 = por %p42, %p43
      %p46 = scmp.ne.s32.totalorder %s29, %s45
      %p47 = scmp.eq.s32.totalorder %s21, 0
      %p48 = por %p46, %p47
      %s50 = sadd.s32 %s49, 1
      %p53 = scmp.eq.s32.totalorder %s15, 1
      %p54 = scmp.ne.s32.totalorder %s49, %s51
      %p55 = scmp.eq.s32.totalorder %s15, 0
      %p56 = por %p54, %p55
      %p57 = scmp.ne.s32.totalorder %s49, %s51
      %p58 = scmp.eq.s32.totalorder %s20, 1
      %p59 = por %p57, %p58
      %p60 = scmp.ne.s32.totalorder %s51, %s52
      %p61 = scmp.eq.s32.totalorder %s20, 0
      %p62 = por %p60, %p61
      %p63 = scmp.ne.s32.totalorder %s51, %s52
      %p64 = scmp.eq.s32.totalorder %s21, 1
      %p65 = por %p63, %p64
      %p67 = scmp.ne.s32.totalorder %s52, %s66
      %p68 = scmp.eq.s32.totalorder %s21, 0
      %p69 = por %p67, %p68
      %s71 = sadd.s32 %s70, 1
      %p74 = scmp.eq.s32.totalorder %s15, 1
      %p75 = scmp.ne.s32.totalorder %s70, %s72
      %p76 = scmp.eq.s32.totalorder %s15, 0
      %p77 = por %p75, %p76
      %p78 = scmp.ne.s32.totalorder %s70, %s72
      %p79 = scmp.eq.s32.totalorder %s20, 1
      %p80 = por %p78, %p79
      %p81 = scmp.ne.s32.totalorder %s72, %s73
      %p82 = scmp.eq.s32.totalorder %s20, 0
      %p83 = por %p81, %p82
      %p84 = scmp.ne.s32.totalorder %s72, %s73
      %p85 = scmp.eq.s32.totalorder %s21, 1
      %p86 = por %p84, %p85
      %p88 = scmp.ne.s32.totalorder %s73, %s87
      %p89 = scmp.eq.s32.totalorder %s21, 0
      %p90 = por %p88, %p89
      %s92 = sadd.s32 %s91, 1
      %p95 = scmp.eq.s32.totalorder %s15, 1
      %p96 = scmp.ne.s32.totalorder %s91, %s93
      %p97 = scmp.eq.s32.totalorder %s15, 0
      %p98 = por %p96, %p97
      %p99 = scmp.ne.s32.totalorder %s91, %s93
      %p100 = scmp.eq.s32.totalorder %s20, 1
      %p101 = por %p99, %p100
      %p102 = scmp.ne.s32.totalorder %s93, %s94
      %p103 = scmp.eq.s32.totalorder %s20, 0
      %p104 = por %p102, %p103
      %p105 = scmp.ne.s32.totalorder %s93, %s94
      %p106 = scmp.eq.s32.totalorder %s21, 1
      %p107 = por %p105, %p106
      %p109 = scmp.ne.s32.totalorder %s94, %s108
      %p110 = scmp.eq.s32.totalorder %s21, 0
      %p111 = por %p109, %p110
      %s112 = ssub.s32 %s15, %s22
      %p113 = scmp.eq.s32.totalorder %s112, 0
      %s115 = sadd.s32 %s114, 1
      %s116 = scalar_select %p113, %s114, %s115
      %p119 = pneg %p113
      %p120 = scmp.eq.s32.totalorder %s15, 1
      %p121 = por %p119, %p120
      %p122 = scmp.ne.s32.totalorder %s114, %s117
      %p123 = scmp.eq.s32.totalorder %s15, 0
      %p124 = por %p122, %p123
      %p125 = scmp.ne.s32.totalorder %s114, %s117
      %p126 = scmp.eq.s32.totalorder %s20, 1
      %p127 = por %p125, %p126
      %p128 = scmp.ne.s32.totalorder %s117, %s118
      %p129 = scmp.eq.s32.totalorder %s20, 0
      %p130 = por %p128, %p129
      %p131 = scmp.ne.s32.totalorder %s117, %s118
      %p132 = scmp.eq.s32.totalorder %s21, 1
      %p133 = por %p131, %p132
      %p135 = scmp.ne.s32.totalorder %s118, %s134
      %p136 = scmp.eq.s32.totalorder %s21, 0
      %p137 = por %p135, %p136
      %s138 = ssub.s32 %s15, %s22
      %p139 = scmp.eq.s32.totalorder %s138, 0
      %s141 = sadd.s32 %s140, 1
      %s142 = scalar_select %p139, %s140, %s141
      %p145 = pneg %p139
      %p146 = scmp.eq.s32.totalorder %s15, 1
      %p147 = por %p145, %p146
      %p148 = scmp.ne.s32.totalorder %s140, %s143
      %p149 = scmp.eq.s32.totalorder %s15, 0
      %p150 = por %p148, %p149
      %p151 = scmp.ne.s32.totalorder %s140, %s143
      %p152 = scmp.eq.s32.totalorder %s20, 1
      %p153 = por %p151, %p152
      %p154 = scmp.ne.s32.totalorder %s143, %s144
      %p155 = scmp.eq.s32.totalorder %s20, 0
      %p156 = por %p154, %p155
      %p157 = scmp.ne.s32.totalorder %s143, %s144
      %p158 = scmp.eq.s32.totalorder %s21, 1
      %p159 = por %p157, %p158
      %p161 = scmp.ne.s32.totalorder %s144, %s160
      %p162 = scmp.eq.s32.totalorder %s21, 0
      %p163 = por %p161, %p162
      %p164 = scmp.le.s32.totalorder 1, %s15
      %p165 = scmp.lt.s32.totalorder %s15, 3
      %p166 = pnand %p164, %p165
      %p167 = pneg %p166
      // Predicated region
      $region9: #{tpu_custom_call.1} parent=5 // pred_check
        _
      $region10: #{tpu_custom_call.1} parent=5 // pred_check_branch
        %169 = sbr.rel (%p166) target = $region12
      $region11: #{tpu_custom_call.1} parent=5 // pred_region
        %s170 = ssub.s32 %s15, 1
        // Predicated region
        $region13: #{tpu_custom_call.1} parent=11 // pred_check
          %p171 = pneg %p62
        $region14: #{tpu_custom_call.1} parent=11 // pred_check_branch
          %173 = sbr.rel (%p171) target = $region16
        $region15: #{tpu_custom_call.1} parent=11 // pred_region
          _
        $region16: #{tpu_custom_call.1} parent=11 // pred_fallthru
          _
        // Predicated region
        $region17: #{tpu_custom_call.1} parent=11 // pred_check
          %p174 = pneg %p83
        $region18: #{tpu_custom_call.1} parent=11 // pred_check_branch
          %176 = sbr.rel (%p174) target = $region20
        $region19: #{tpu_custom_call.1} parent=11 // pred_region
          _
        $region20: #{tpu_custom_call.1} parent=11 // pred_fallthru
          _
        // Predicated region
        $region21: #{tpu_custom_call.1} parent=11 // pred_check
          %p177 = pneg %p104
        $region22: #{tpu_custom_call.1} parent=11 // pred_check_branch
          %179 = sbr.rel (%p177) target = $region24
        $region23: #{tpu_custom_call.1} parent=11 // pred_region
          _
        $region24: #{tpu_custom_call.1} parent=11 // pred_fallthru
          _
      $region12: #{tpu_custom_call.1} parent=5 // pred_fallthru
        _
      %p180 = scmp.lt.s32.totalorder %s15, 2
      // Predicated region
      $region25: #{tpu_custom_call.1} parent=5 // pred_check
        %p181 = pneg %p180
      $region26: #{tpu_custom_call.1} parent=5 // pred_check_branch
        %183 = sbr.rel (%p181) target = $region28
      $region27: #{tpu_custom_call.1} parent=5 // pred_region
        // Predicated region
        $region29: #{tpu_custom_call.1} parent=27 // pred_check
          %p184 = pneg %p35
        $region30: #{tpu_custom_call.1} parent=27 // pred_check_branch
          %186 = sbr.rel (%p184) target = $region32
        $region31: #{tpu_custom_call.1} parent=27 // pred_region
          %p187 = scmp.lt.s32.totalorder %s15, 1
          %s188 = scalar_select %p187, %s15, 1
          %s189 = smul.addr %s188, 8
          %s190 = scalar_lea.vmem %s0, %s189
        $region32: #{tpu_custom_call.1} parent=27 // pred_fallthru
          _
      $region28: #{tpu_custom_call.1} parent=5 // pred_fallthru
        _
      %p191 = scmp.le.s32.totalorder 1, %s15
      %p192 = scmp.lt.s32.totalorder %s15, 3
      %p193 = pnand %p191, %p192
      %p194 = pneg %p193
      // Predicated region
      $region33: #{tpu_custom_call.1} parent=5 // pred_check
        _
      $region34: #{tpu_custom_call.1} parent=5 // pred_check_branch
        %196 = sbr.rel (%p193) target = $region36
      $region35: #{tpu_custom_call.1} parent=5 // pred_region
        %s197 = ssub.s32 %s15, 1
        %p198 = scmp.lt.s32.totalorder %s20, 1
        %s199 = scalar_select %p198, %s20, 1
        %s200 = smul.addr %s199, 8
        %s201 = scalar_lea.vmem %s0, %s200
        %p202 = pneg %p41
        %p203 = pneg %p38
        %p204 = pneg %p62
        %p205 = pneg %p59
        %p206 = pneg %p83
        %p207 = pneg %p80
        %p208 = pneg %p104
        %p209 = pneg %p101
        %p210 = pneg %p130
        %p211 = pneg %p127
        %s212 = sand.u32 %s117, 1
        %s213 = scalar_lea.sflag [#allocation3], %s212
        %s214 = sand.u32 %s117, 1
        %s215 = smul.addr %s214, 24
        %s216 = scalar_lea.vmem [#allocation2], %s215
        %p217 = pneg %p156
        %p218 = pneg %p153
        %p219 = scmp.lt.s32.totalorder %s20, 1
        %s220 = scalar_select %p219, %s20, 1
        %s221 = smul.addr %s220, 8
        %s222 = scalar_lea.vmem %s5, %s221
        %p223 = scmp.lt.s32.totalorder %s20, 1
        %s224 = scalar_select %p223, %s20, 1
        %s225 = smul.addr %s224, 8
        %s226 = scalar_lea.vmem %s0, %s225
        %p227 = scmp.lt.s32.totalorder %s20, 1
        %s228 = scalar_select %p227, %s20, 1
        %s229 = smul.addr %s228, 8
        %s230 = scalar_lea.vmem %s5, %s229
        %v231 = vld [vmem:[%s226] sm:$0xff]
        %v232 = vld [vmem:[%s2] sm:$0x7]
        %v233 = vld [vmem:[%s3] sm:$0x7]
        %v234 = vld [vmem:[%s1] sm:$0x1]
        %v235 = vld [vmem:[%s1 + $0x1] sm:$0x1]
        %v236 = vld [vmem:[%s1 + $0x2] sm:$0x1]
        %238 = vset.pattern.permute.xlu0 0
        %239 = vperm.xlu0 %238, %v231
        %v240 = vpop.permute.xlu0 %239
        %v242 = vlaneseq
        %v243 = vshrl.u32 %v242, 7
        %v244 = vsub.s32 0, %v243
        %v245 = vrot.slane %v234, %v244
        %v246 = vsub.f32 %v240, %v245
        %v247 = vmul.f32 %v246, %v246
        %248 = vset.pattern.permute.xlu0 1
        %249 = vperm.xlu0 %248, %v231
        %v250 = vpop.permute.xlu0 %249
        %v252 = vlaneseq
        %v253 = vshrl.u32 %v252, 7
        %v254 = vsub.s32 0, %v253
        %v255 = vrot.slane %v235, %v254
        %v256 = vsub.f32 %v250, %v255
        %v257 = vmul.f32 %v256, %v256
        %v258 = vadd.f32 %v247, %v257
        %259 = vset.pattern.permute.xlu0 2
        %260 = vperm.xlu0 %259, %v231
        %v261 = vpop.permute.xlu0 %260
        %v263 = vlaneseq
        %v264 = vshrl.u32 %v263, 7
        %v265 = vsub.s32 0, %v264
        %v266 = vrot.slane %v236, %v265
        %v267 = vsub.f32 %v261, %v266
        %v268 = vmul.f32 %v267, %v267
        %v269 = vadd.f32 %v258, %v268
        %v270 = vadd.f32 %v269, 1.0
        %v271 = vrcp.pop %v270
        %v272 = vmul.f32 1.0, %v271
        %v273 = vmul.f32 %v272, %v272
        %v274 = vmul.f32 %v273, -2.0
        %v275 = vlaneseq
        %v276 = vshrl.u32 %v275, 7
        %v277 = vlaneseq
        %v278 = vand.u32 %v277, 127
        %s279 = smul.u32 %s20, 8
        %v280 = vstv %s279
        %v281 = vsub.s32 %v278, %v280
        %vm282 = vcmp.eq.s32.totalorder %v281, %v276
        %v283 = vlaneseq
        %v284 = vshrl.u32 %v283, 7
        %v285 = vsub.s32 0, %v284
        %v286 = vrot.slane %v232, %v285
        %v287 = vmul.f32 %v240, %v286
        %v288 = vlaneseq
        %v289 = vshrl.u32 %v288, 7
        %v290 = vsub.s32 1, %v289
        %v291 = vrot.slane %v232, %v290
        %v292 = vmul.f32 %v250, %v291
        %v293 = vadd.f32 %v287, %v292
        %v294 = vlaneseq
        %v295 = vshrl.u32 %v294, 7
        %v296 = vsub.s32 2, %v295
        %v297 = vrot.slane %v232, %v296
        %v298 = vmul.f32 %v261, %v297
        %v299 = vadd.f32 %v293, %v298
        %v300 = vtanh.pop %v299
        %v301 = vmul.f32 %v300, %v300
        %v302 = vsub.f32 1.0, %v301
        %v303 = vmul.f32 %v274, %v246
        %vm304 = vcmask 130048
        %v305 = vsel %vm304, %v303, 0.0
        %306 = vadd.xlane.f32.xlu0 %v305
        %v307 = vpop.xlane.xlu0 %306
        %v308 = vlaneseq
        %v309 = vshrl.u32 %v308, 7
        %v310 = vsub.s32 0, %v309
        %v311 = vrot.slane %v233, %v310
        %v312 = vmul.f32 %v302, %v311
        %vm313 = vcmask 261120
        %v314 = vsel %vm313, %v312, 0.0
        %315 = vadd.xlane.f32.xlu0 %v314
        %v316 = vpop.xlane.xlu0 %315
        %v317 = vadd.f32 %v316, %v307
        %v318 = vsub.f32 0.0, %v317
        %v319 = vsel %vm282, %v318, %v303
        %320 = vst.msk [vmem:[%s216] sm:$0xff] %vm304, %v319
        %v321 = vmul.f32 %v307, 2.0
        %v322 = vadd.f32 %v316, %v321
        %v323 = vsub.f32 0.0, %v322
        %v324 = vmul.f32 %v274, %v256
        %v325 = vsel %vm304, %v324, 0.0
        %326 = vadd.xlane.f32.xlu0 %v325
        %v327 = vpop.xlane.xlu0 %326
        %v328 = vlaneseq
        %v329 = vshrl.u32 %v328, 7
        %v330 = vsub.s32 1, %v329
        %v331 = vrot.slane %v233, %v330
        %v332 = vmul.f32 %v302, %v331
        %v333 = vsel %vm313, %v332, 0.0
        %334 = vadd.xlane.f32.xlu0 %v333
        %v335 = vpop.xlane.xlu0 %334
        %v336 = vadd.f32 %v335, %v327
        %v337 = vsub.f32 0.0, %v336
        %v338 = vsel %vm282, %v337, %v324
        %s339 = scalar_lea.vmem %s216, 8 [#allocation2]
        %340 = vst.msk [vmem:[%s339] sm:$0xff] %vm304, %v338
        %v341 = vmul.f32 %v327, 2.0
        %v342 = vadd.f32 %v335, %v341
        %v343 = vsub.f32 0.0, %v342
        %v344 = vmul.f32 %v274, %v267
        %v345 = vsel %vm304, %v344, 0.0
        %346 = vadd.xlane.f32.xlu0 %v345
        %v347 = vpop.xlane.xlu0 %346
        %v348 = vlaneseq
        %v349 = vshrl.u32 %v348, 7
        %v350 = vsub.s32 2, %v349
        %v351 = vrot.slane %v233, %v350
        %v352 = vmul.f32 %v302, %v351
        %v353 = vsel %vm313, %v352, 0.0
        %354 = vadd.xlane.f32.xlu0 %v353
        %v355 = vpop.xlane.xlu0 %354
        %v356 = vadd.f32 %v355, %v347
        %v357 = vsub.f32 0.0, %v356
        %v358 = vsel %vm282, %v357, %v344
        %s359 = scalar_lea.vmem %s216, 16 [#allocation2]
        %360 = vst.msk [vmem:[%s359] sm:$0xff] %vm304, %v358
        %v361 = vmul.f32 %v347, 2.0
        %v362 = vadd.f32 %v355, %v361
        %v363 = vsub.f32 0.0, %v362
        %vm364 = vcmask 7168
        %v365 = vsel %vm364, %v323, %v343
        %vm366 = vcmask 15360
        %v367 = vsel %vm366, %v365, %v363
        %vm368 = vcmask 23552
        %369 = vst.msk [vmem:[%s230] sm:$0xff] %vm368, %v367
        %s370 = sand.u32 %s117, 1
        %s371 = scalar_lea.sflag [#allocation3], %s370
        %s372 = sand.u32 %s117, 1
        %s373 = smul.addr %s372, 24
        %s374 = scalar_lea.vmem [#allocation2], %s373
        %p375 = scmp.lt.s32.totalorder %s20, 1
        %s376 = scalar_select %p375, %s20, 1
        %s377 = smul.addr %s376, 8
        %s378 = scalar_lea.vmem %s5, %s377
        // Predicated region
        $region37: #{tpu_custom_call.1} parent=35 // pred_check
          %p379 = pneg %p127
        $region38: #{tpu_custom_call.1} parent=35 // pred_check_branch
          %381 = sbr.rel (%p379) target = $region40
        $region39: #{tpu_custom_call.1} parent=35 // pred_region
          %s383 = ssub.s32 384, 384
          %384 = vsyncadd %s371, %s383
          %s385 = smul.addr %s20, 128
          %s386 = scalar_lea.hbm %s4, %s385
          %s387 = sshll.u32 %s374, 4
          %s388 = int_to_ptr.vmem [resolvable:$true] %s387
          %393 = dma.vmem_to_hbm [thread:$0]  %s388, 384, %s386, %s371, 128, 256, 8
        $region40: #{tpu_custom_call.1} parent=35 // pred_fallthru
          _
        // Predicated region
        $region41: #{tpu_custom_call.1} parent=35 // pred_check
          %p394 = pneg %p153
        $region42: #{tpu_custom_call.1} parent=35 // pred_check_branch
          %396 = sbr.rel (%p394) target = $region44
        $region43: #{tpu_custom_call.1} parent=35 // pred_region
          _
        $region44: #{tpu_custom_call.1} parent=35 // pred_fallthru
          _
      $region36: #{tpu_custom_call.1} parent=5 // pred_fallthru
        _
      %p397 = scmp.le.s32.totalorder 2, %s15
      // Predicated region
      $region45: #{tpu_custom_call.1} parent=5 // pred_check
        %p398 = pneg %p397
      $region46: #{tpu_custom_call.1} parent=5 // pred_check_branch
        %400 = sbr.rel (%p398) target = $region48
      $region47: #{tpu_custom_call.1} parent=5 // pred_region
        %s401 = ssub.s32 %s15, 2
        // Predicated region
        $region49: #{tpu_custom_call.1} parent=47 // pred_check
          %p402 = pneg %p133
        $region50: #{tpu_custom_call.1} parent=47 // pred_check_branch
          %404 = sbr.rel (%p402) target = $region52
        $region51: #{tpu_custom_call.1} parent=47 // pred_region
          %s405 = sand.u32 %s118, 1
          %s406 = scalar_lea.sflag [#allocation3], %s405
          %s407 = sand.u32 %s118, 1
          %s408 = smul.addr %s407, 24
          %s409 = scalar_lea.vmem [#allocation2], %s408
          %410 = dma.done %s406, 384
        $region52: #{tpu_custom_call.1} parent=47 // pred_fallthru
          _
        // Predicated region
        $region53: #{tpu_custom_call.1} parent=47 // pred_check
          %p411 = pneg %p159
        $region54: #{tpu_custom_call.1} parent=47 // pred_check_branch
          %413 = sbr.rel (%p411) target = $region56
        $region55: #{tpu_custom_call.1} parent=47 // pred_region
          %p414 = scmp.lt.s32.totalorder %s21, 1
          %s415 = scalar_select %p414, %s21, 1
          %s416 = smul.addr %s415, 8
          %s417 = scalar_lea.vmem %s5, %s416
        $region56: #{tpu_custom_call.1} parent=47 // pred_fallthru
          _
      $region48: #{tpu_custom_call.1} parent=5 // pred_fallthru
        _
    $region6: #{tpu_custom_call.1} parent=1 // loop_footer
      %s19 = sadd.s32 1, %s15
    $region7: #{tpu_custom_call.1} parent=1 // loop_footer_branch
      %14 = sbr.rel target = $region3
    $region8: #{tpu_custom_call.1} parent=1 // loop_exit
      _
    %418 = vsyncpa [#allocation3], 1
    %s419 = scalar_lea.sflag [#allocation3], 1
    %420 = vsyncpa %s419, 1

</llo_original>
